<compile_context>
chip_gen: v7x
topology: tpu7x:2x2x1
jax: 0.10.0
libtpu: 0.0.40
codegen_flags: <defaults>
</compile_context>

<pallas_src>
import jax
import jax.numpy as jnp
from jax.experimental import pallas as pl
from jax.experimental.pallas import tpu as pltpu

IN_F, HID, OUT_F = 784, 200, 10          # logical (PyTorch) feature sizes
IN_P, HID_P, OUT_P = 896, 256, 128       # lane-padded (multiples of 128)


def _round_up(x, m):
    return ((x + m - 1) // m) * m


def mlp_kernel(x_ref, w1_ref, b1_ref, w2_ref, b2_ref, w3_ref, b3_ref, o_ref):
    # Matmuls run on the MXU (bf16 or f32 inputs, f32 accumulation).
    # Bias-add + ReLU stay in f32 (biases are stored f32) -> exact & cheap on VPU.
    x = x_ref[...]                                                    # (TM, 896)

    h1 = jnp.dot(x, w1_ref[...], preferred_element_type=jnp.float32)  # (TM, 256)
    h1 = jnp.maximum(h1 + b1_ref[...], 0.0)

    h2 = jnp.dot(h1.astype(w2_ref.dtype), w2_ref[...],
                 preferred_element_type=jnp.float32)                  # (TM, 256)
    h2 = jnp.maximum(h2 + b2_ref[...], 0.0)

    o = jnp.dot(h2.astype(w3_ref.dtype), w3_ref[...],
                preferred_element_type=jnp.float32)                   # (TM, 128)
    o_ref[...] = (o + b3_ref[...]).astype(o_ref.dtype)


def prepare_params(params, compute_dtype=jnp.bfloat16):
    """One-time packing: transpose (out,in)->(in,out), zero-pad lane dims to
    multiples of 128, cast weights to the matmul dtype; keep biases f32."""
    w1, b1, w2, b2, w3, b3 = params

    def pack_w(w, in_p, out_p):
        wt = w.T                                       # (in, out)
        wt = jnp.pad(wt, ((0, in_p - wt.shape[0]), (0, out_p - wt.shape[1])))
        return wt.astype(compute_dtype)

    def pack_b(b, out_p):
        return jnp.pad(b, (0, out_p - b.shape[0])).reshape(1, out_p).astype(jnp.float32)

    return (pack_w(w1, IN_P, HID_P), pack_b(b1, HID_P),
            pack_w(w2, HID_P, HID_P), pack_b(b2, HID_P),
            pack_w(w3, HID_P, OUT_P), pack_b(b3, OUT_P))


def mlp_forward(x_nchw, packed_params, *, tile_m=256):
    """x_nchw: (B, 1, 28, 28). Returns logits (B, 10) in float32."""
    w1, b1, w2, b2, w3, b3 = packed_params
    compute_dtype = w1.dtype

    B = x_nchw.shape[0]
    x = x_nchw.reshape(B, -1)                                   # (B, 784)

    # Batch tile: multiple of 8 sublanes, capped at tile_m; pad B up to a tile multiple.
    tm = min(tile_m, _round_up(max(B, 1), 8))
    b_pad = _round_up(B, tm)
    x = jnp.pad(x, ((0, b_pad - B), (0, IN_P - IN_F))).astype(compute_dtype)

    out = pl.pallas_call(
        mlp_kernel,
        out_shape=jax.ShapeDtypeStruct((b_pad, OUT_P), jnp.float32),
        grid=(b_pad // tm,),
        in_specs=[
            pl.BlockSpec((tm, IN_P),     lambda i: (i, 0)),     # x  (batch-tiled)
            pl.BlockSpec((IN_P, HID_P),  lambda i: (0, 0)),     # w1 (VMEM-resident)
            pl.BlockSpec((1, HID_P),     lambda i: (0, 0)),     # b1
            pl.BlockSpec((HID_P, HID_P), lambda i: (0, 0)),     # w2
            pl.BlockSpec((1, HID_P),     lambda i: (0, 0)),     # b2
            pl.BlockSpec((HID_P, OUT_P), lambda i: (0, 0)),     # w3
            pl.BlockSpec((1, OUT_P),     lambda i: (0, 0)),     # b3
        ],
        out_specs=pl.BlockSpec((tm, OUT_P), lambda i: (i, 0)),
        compiler_params=pltpu.CompilerParams(
            dimension_semantics=("parallel",)),
    )(x, w1, b1, w2, b2, w3, b3)

    return out[:B, :OUT_F]                                      # (B, 10)


def init_params(key):
    """Deterministic init mimicking PyTorch nn.Linear defaults
    (uniform(-1/sqrt(fan_in), 1/sqrt(fan_in)) for both weight and bias)."""
    def linear(key, out_f, in_f):
        kw, kb = jax.random.split(key)
        bound = 1.0 / jnp.sqrt(in_f)
        w = jax.random.uniform(kw, (out_f, in_f), jnp.float32, -bound, bound)
        b = jax.random.uniform(kb, (out_f,), jnp.float32, -bound, bound)
        return w, b

    k1, k2, k3 = jax.random.split(key, 3)
    w1, b1 = linear(k1, 200, 784)
    w2, b2 = linear(k2, 200, 200)
    w3, b3 = linear(k3, 10, 200)
    return (w1, b1, w2, b2, w3, b3)


def mlp_reference(x_nchw, params):
    """Pure-JAX f32 reference matching the PyTorch forward exactly."""
    w1, b1, w2, b2, w3, b3 = params
    x = x_nchw.reshape(x_nchw.shape[0], -1)
    x = jax.nn.relu(x @ w1.T + b1)
    x = jax.nn.relu(x @ w2.T + b2)
    return x @ w3.T + b3


if __name__ == "__main__":
    key = jax.random.PRNGKey(0)
    kx, kp = jax.random.split(key)

    # Small MNIST-shaped batch: (B=8, 1, 28, 28) -> flatten -> 784.
    x = jax.random.normal(kx, (8, 1, 28, 28), jnp.float32)
    params = init_params(kp)
    ref = mlp_reference(x, params)

    # 1) f32 matmul path: must match reference to tight tolerance (padding/transpose are exact).
    packed_f32 = prepare_params(params, compute_dtype=jnp.float32)
    out_f32 = jax.block_until_ready(mlp_forward(x, packed_f32))
    assert out_f32.shape == (8, 10)
    assert jnp.allclose(out_f32, ref, atol=1e-4, rtol=1e-4), "f32 path mismatch vs JAX reference"

    # 2) bf16 matmul inputs (MXU-native on v6e/v7x), f32 accumulation -> relaxed tolerance.
    packed_bf16 = prepare_params(params, compute_dtype=jnp.bfloat16)
    out_bf16 = jax.block_until_ready(mlp_forward(x, packed_bf16))
    assert out_bf16.shape == (8, 10)
    assert jnp.allclose(out_bf16, ref, atol=5e-2, rtol=5e-2), "bf16 path mismatch vs JAX reference"

    # 3) Larger batch exercising the batch-tiled "parallel" grid (2 grid steps, ragged pad).
    xb = jax.random.normal(kx, (300, 1, 28, 28), jnp.float32)
    refb = mlp_reference(xb, params)
    outb = jax.block_until_ready(mlp_forward(xb, packed_bf16))
    assert outb.shape == (300, 10)
    assert jnp.allclose(outb, refb, atol=5e-2, rtol=5e-2), "batched bf16 path mismatch"

    print("KERNEL_OK")
</pallas_src>

<mosaic_0001>
module attributes {stable_mosaic.version = 11 : i64} {
  func.func @mlp_kernel(%arg0: i32, %arg1: memref<8x896xf32, #tpu.memory_space<vmem>>, %arg2: memref<896x256xf32, #tpu.memory_space<vmem>>, %arg3: memref<1x256xf32, #tpu.memory_space<vmem>>, %arg4: memref<256x256xf32, #tpu.memory_space<vmem>>, %arg5: memref<1x256xf32, #tpu.memory_space<vmem>>, %arg6: memref<256x128xf32, #tpu.memory_space<vmem>>, %arg7: memref<1x128xf32, #tpu.memory_space<vmem>>, %arg8: memref<8x128xf32, #tpu.memory_space<vmem>>) attributes {dimension_semantics = [#tpu.dimension_semantics<parallel>], iteration_bounds = array<i64: 1>, scalar_prefetch = 0 : i64, scratch_operands = 0 : i64, tpu.core_type = #tpu.core_type<tc>, window_params = [{transform_indices = @transform_0, window_bounds = array<i64: 8, 896>}, {pipeline_mode = #tpu.pipeline_mode<synchronous>, transform_indices = @transform_1, window_bounds = array<i64: 896, 256>}, {pipeline_mode = #tpu.pipeline_mode<synchronous>, transform_indices = @transform_2, window_bounds = array<i64: 1, 256>}, {pipeline_mode = #tpu.pipeline_mode<synchronous>, transform_indices = @transform_3, window_bounds = array<i64: 256, 256>}, {pipeline_mode = #tpu.pipeline_mode<synchronous>, transform_indices = @transform_4, window_bounds = array<i64: 1, 256>}, {pipeline_mode = #tpu.pipeline_mode<synchronous>, transform_indices = @transform_5, window_bounds = array<i64: 256, 128>}, {pipeline_mode = #tpu.pipeline_mode<synchronous>, transform_indices = @transform_6, window_bounds = array<i64: 1, 128>}, {transform_indices = @transform_7, window_bounds = array<i64: 8, 128>}]} {
    %c0 = arith.constant 0 : index
    %c0_0 = arith.constant 0 : index
    %0 = vector.load %arg1[%c0, %c0_0] : memref<8x896xf32, #tpu.memory_space<vmem>>, vector<8x896xf32>
    %c0_1 = arith.constant 0 : index
    %c0_2 = arith.constant 0 : index
    %1 = vector.load %arg2[%c0_1, %c0_2] : memref<896x256xf32, #tpu.memory_space<vmem>>, vector<896x256xf32>
    %cst = arith.constant dense<0.000000e+00> : vector<8x256xf32>
    %2 = tpu.matmul %0, %1, %cst {dimension_numbers = #tpu.dot_dimension_numbers<[1], [0], [0], [1], [0, 0, 1, 1], [], []>} : vector<8x896xf32>, vector<896x256xf32>, vector<8x256xf32> -> vector<8x256xf32>
    %c0_3 = arith.constant 0 : index
    %c0_4 = arith.constant 0 : index
    %3 = vector.load %arg3[%c0_3, %c0_4] : memref<1x256xf32, #tpu.memory_space<vmem>>, vector<1x256xf32>
    %4 = vector.broadcast %3 : vector<1x256xf32> to vector<8x256xf32>
    %5 = arith.addf %2, %4 : vector<8x256xf32>
    %cst_5 = arith.constant 0.000000e+00 : f32
    %6 = vector.broadcast %cst_5 : f32 to vector<8x256xf32>
    %7 = arith.maximumf %5, %6 : vector<8x256xf32>
    %c0_6 = arith.constant 0 : index
    %c0_7 = arith.constant 0 : index
    %8 = vector.load %arg4[%c0_6, %c0_7] : memref<256x256xf32, #tpu.memory_space<vmem>>, vector<256x256xf32>
    %cst_8 = arith.constant dense<0.000000e+00> : vector<8x256xf32>
    %9 = tpu.matmul %7, %8, %cst_8 {dimension_numbers = #tpu.dot_dimension_numbers<[1], [0], [0], [1], [0, 0, 1, 1], [], []>} : vector<8x256xf32>, vector<256x256xf32>, vector<8x256xf32> -> vector<8x256xf32>
    %c0_9 = arith.constant 0 : index
    %c0_10 = arith.constant 0 : index
    %10 = vector.load %arg5[%c0_9, %c0_10] : memref<1x256xf32, #tpu.memory_space<vmem>>, vector<1x256xf32>
    %11 = vector.broadcast %10 : vector<1x256xf32> to vector<8x256xf32>
    %12 = arith.addf %9, %11 : vector<8x256xf32>
    %cst_11 = arith.constant 0.000000e+00 : f32
    %13 = vector.broadcast %cst_11 : f32 to vector<8x256xf32>
    %14 = arith.maximumf %12, %13 : vector<8x256xf32>
    %c0_12 = arith.constant 0 : index
    %c0_13 = arith.constant 0 : index
    %15 = vector.load %arg6[%c0_12, %c0_13] : memref<256x128xf32, #tpu.memory_space<vmem>>, vector<256x128xf32>
    %cst_14 = arith.constant dense<0.000000e+00> : vector<8x128xf32>
    %16 = tpu.matmul %14, %15, %cst_14 {dimension_numbers = #tpu.dot_dimension_numbers<[1], [0], [0], [1], [0, 0, 1, 1], [], []>} : vector<8x256xf32>, vector<256x128xf32>, vector<8x128xf32> -> vector<8x128xf32>
    %c0_15 = arith.constant 0 : index
    %c0_16 = arith.constant 0 : index
    %17 = vector.load %arg7[%c0_15, %c0_16] : memref<1x128xf32, #tpu.memory_space<vmem>>, vector<1x128xf32>
    %18 = vector.broadcast %17 : vector<1x128xf32> to vector<8x128xf32>
    %19 = arith.addf %16, %18 : vector<8x128xf32>
    %c0_17 = arith.constant 0 : index
    %c0_18 = arith.constant 0 : index
    %20 = vector.load %arg8[%c0_17, %c0_18] : memref<8x128xf32, #tpu.memory_space<vmem>>, vector<8x128xf32>
    tpu.vector_store %arg8[%c0_17, %c0_18], %19 {strides = array<i32>} : memref<8x128xf32, #tpu.memory_space<vmem>>, vector<8x128xf32>,
    return
  }
  func.func @transform_0(%arg0: i32) -> (i32, i32) {
    %c0_i32 = arith.constant 0 : i32
    %c0_i32_0 = arith.constant 0 : i32
    return %arg0, %c0_i32 : i32, i32
  }
  func.func @transform_1(%arg0: i32) -> (i32, i32) {
    %c0_i32 = arith.constant 0 : i32
    %c0_i32_0 = arith.constant 0 : i32
    %c0_i32_1 = arith.constant 0 : i32
    return %c0_i32, %c0_i32_0 : i32, i32
  }
  func.func @transform_2(%arg0: i32) -> (i32, i32) {
    %c0_i32 = arith.constant 0 : i32
    %c0_i32_0 = arith.constant 0 : i32
    %c0_i32_1 = arith.constant 0 : i32
    return %c0_i32, %c0_i32_0 : i32, i32
  }
  func.func @transform_3(%arg0: i32) -> (i32, i32) {
    %c0_i32 = arith.constant 0 : i32
    %c0_i32_0 = arith.constant 0 : i32
    %c0_i32_1 = arith.constant 0 : i32
    return %c0_i32, %c0_i32_0 : i32, i32
  }
  func.func @transform_4(%arg0: i32) -> (i32, i32) {
    %c0_i32 = arith.constant 0 : i32
    %c0_i32_0 = arith.constant 0 : i32
    %c0_i32_1 = arith.constant 0 : i32
    return %c0_i32, %c0_i32_0 : i32, i32
  }
  func.func @transform_5(%arg0: i32) -> (i32, i32) {
    %c0_i32 = arith.constant 0 : i32
    %c0_i32_0 = arith.constant 0 : i32
    %c0_i32_1 = arith.constant 0 : i32
    return %c0_i32, %c0_i32_0 : i32, i32
  }
  func.func @transform_6(%arg0: i32) -> (i32, i32) {
    %c0_i32 = arith.constant 0 : i32
    %c0_i32_0 = arith.constant 0 : i32
    %c0_i32_1 = arith.constant 0 : i32
    return %c0_i32, %c0_i32_0 : i32, i32
  }
  func.func @transform_7(%arg0: i32) -> (i32, i32) {
    %c0_i32 = arith.constant 0 : i32
    %c0_i32_0 = arith.constant 0 : i32
    return %arg0, %c0_i32 : i32, i32
  }
}

</mosaic_0001>

<llo_original>
// kernel: tpu_custom_call.1
$region0: #{tpu_custom_call.1}
  #allocation0 [shape = 'u32[]', space=smem, size = 0x4, offset = 0x4, fixed_abs, tag = 'smem constant byte address 0x4 - core index']
  #allocation1 [shape = 'u32[144,128]{1,0:T(1,128)}', space=vmem, size = 0x12000, scoped, tag = 'internal scratch']
  %s0 = inlined_call_operand.hbm [shape: f32[8,896], index: 0, kind: input, shape index: {}]
  %s1 = inlined_call_operand.hbm [shape: f32[896,256], index: 1, kind: input, shape index: {}]
  %s2 = inlined_call_operand.vmem [shape: f32[1,256], index: 2, kind: input, shape index: {}]
  %s3 = inlined_call_operand.hbm [shape: f32[256,256], index: 3, kind: input, shape index: {}]
  %s4 = inlined_call_operand.vmem [shape: f32[1,256], index: 4, kind: input, shape index: {}]
  %s5 = inlined_call_operand.hbm [shape: f32[256,128], index: 5, kind: input, shape index: {}]
  %s6 = inlined_call_operand.vmem [shape: f32[1,128], index: 6, kind: input, shape index: {}]
  %s7 = inlined_call_operand.hbm [shape: f32[8,128], index: 7, kind: output, shape index: {}]
  %s8 = sld [smem:[#allocation0]]
  $region54: #{tpu_custom_call.1} parent=0
    _
  %s10 = ssub.s32 1, %s8
  %s11 = scalar_select 0, %s10, %s8
  $region1: #{tpu_custom_call.1} parent=0
    #allocation2 [shape = 'u8[28672]{0}', space=vmem, size = 0x7000, scoped, tag = 'input window, operand 0, single buffered']
    #allocation3 [shape = 's32[1]{0}', space=sflag, size = 0x4, scoped, tag = 'scoped memory for tpu_custom_call.1']
    #allocation4 [shape = 's32[1]{0}', space=sflag, size = 0x4, scoped, tag = 'scoped memory for tpu_custom_call.1']
    #allocation5 [shape = 'u8[917504]{0}', space=vmem, size = 0xe0000, scoped, tag = 'input window, operand 1, single buffered']
    #allocation6 [shape = 's32[1]{0}', space=sflag, size = 0x4, scoped, tag = 'scoped memory for tpu_custom_call.1']
    #allocation7 [shape = 'u8[262144]{0}', space=vmem, size = 0x40000, scoped, tag = 'input window, operand 3, single buffered']
    #allocation8 [shape = 'u8[131072]{0}', space=vmem, size = 0x20000, scoped, tag = 'input window, operand 5, single buffered']
    #allocation9 [shape = 's32[1]{0}', space=sflag, size = 0x4, scoped, tag = 'scoped memory for tpu_custom_call.1']
    #allocation10 [shape = 'u8[4096]{0}', space=vmem, size = 0x1000, scoped, tag = 'output window, operand 0, single buffered']
    %12 = vsyncpa [#allocation3], 0
    %13 = vsyncpa [#allocation6], 0
    %14 = vsyncpa [#allocation9], 0
    %15 = vsyncpa [#allocation4], 0
    // Predicated region
    $region2: #{tpu_custom_call.1} parent=1 // pred_check
      _
    $region3: #{tpu_custom_call.1} parent=1 // pred_check_branch
      %17 = sbr.rel (0) target = $region5
    $region4: #{tpu_custom_call.1} parent=1 // pred_region
      %s19 = ssub.s32 896, 896
      %20 = vsyncadd [#allocation3], %s19
      %s22 = sshll.u32 [#allocation2], 4
      %s23 = int_to_ptr.vmem [resolvable:$true] %s22
      %25 = dma.hbm_to_vmem [thread:$0]  %s0, 896, %s23, [#allocation3]
    $region5: #{tpu_custom_call.1} parent=1 // pred_fallthru
      _
    // Predicated region
    $region6: #{tpu_custom_call.1} parent=1 // pred_check
      _
    $region7: #{tpu_custom_call.1} parent=1 // pred_check_branch
      %27 = sbr.rel (0) target = $region9
    $region8: #{tpu_custom_call.1} parent=1 // pred_region
      %s29 = ssub.s32 28672, 28672
      %30 = vsyncadd [#allocation6], %s29
      %s31 = sshll.u32 [#allocation5], 4
      %s32 = int_to_ptr.vmem [resolvable:$true] %s31
      %37 = dma.hbm_to_vmem [thread:$0]  %s1, 28672, %s32, [#allocation6], 256, 256, 16
    $region9: #{tpu_custom_call.1} parent=1 // pred_fallthru
      _
    // Predicated region
    $region10: #{tpu_custom_call.1} parent=1 // pred_check
      _
    $region11: #{tpu_custom_call.1} parent=1 // pred_check_branch
      %39 = sbr.rel (0) target = $region13
    $region12: #{tpu_custom_call.1} parent=1 // pred_region
      _
    $region13: #{tpu_custom_call.1} parent=1 // pred_fallthru
      _
    // Predicated region
    $region14: #{tpu_custom_call.1} parent=1 // pred_check
      _
    $region15: #{tpu_custom_call.1} parent=1 // pred_check_branch
      %41 = sbr.rel (0) target = $region17
    $region16: #{tpu_custom_call.1} parent=1 // pred_region
      %s43 = ssub.s32 8192, 8192
      %44 = vsyncadd [#allocation6], %s43
      %s45 = sshll.u32 [#allocation7], 4
      %s46 = int_to_ptr.vmem [resolvable:$true] %s45
      %51 = dma.hbm_to_vmem [thread:$0]  %s3, 8192, %s46, [#allocation6], 256, 256, 16
    $region17: #{tpu_custom_call.1} parent=1 // pred_fallthru
      _
    // Predicated region
    $region18: #{tpu_custom_call.1} parent=1 // pred_check
      _
    $region19: #{tpu_custom_call.1} parent=1 // pred_check_branch
      %53 = sbr.rel (0) target = $region21
    $region20: #{tpu_custom_call.1} parent=1 // pred_region
      _
    $region21: #{tpu_custom_call.1} parent=1 // pred_fallthru
      _
    // Predicated region
    $region22: #{tpu_custom_call.1} parent=1 // pred_check
      _
    $region23: #{tpu_custom_call.1} parent=1 // pred_check_branch
      %55 = sbr.rel (0) target = $region25
    $region24: #{tpu_custom_call.1} parent=1 // pred_region
      %s57 = ssub.s32 4096, 4096
      %58 = vsyncadd [#allocation9], %s57
      %s59 = sshll.u32 [#allocation8], 4
      %s60 = int_to_ptr.vmem [resolvable:$true] %s59
      %65 = dma.hbm_to_vmem [thread:$0]  %s5, 4096, %s60, [#allocation9], 128, 128, 8
    $region25: #{tpu_custom_call.1} parent=1 // pred_fallthru
      _
    // Predicated region
    $region26: #{tpu_custom_call.1} parent=1 // pred_check
      _
    $region27: #{tpu_custom_call.1} parent=1 // pred_check_branch
      %67 = sbr.rel (0) target = $region29
    $region28: #{tpu_custom_call.1} parent=1 // pred_region
      _
    $region29: #{tpu_custom_call.1} parent=1 // pred_fallthru
      _
    // Predicated region
    $region30: #{tpu_custom_call.1} parent=1 // pred_check
      _
    $region31: #{tpu_custom_call.1} parent=1 // pred_check_branch
      %69 = sbr.rel (0) target = $region33
    $region32: #{tpu_custom_call.1} parent=1 // pred_region
      %70 = dma.done [#allocation3], 896
    $region33: #{tpu_custom_call.1} parent=1 // pred_fallthru
      _
    // Predicated region
    $region34: #{tpu_custom_call.1} parent=1 // pred_check
      _
    $region35: #{tpu_custom_call.1} parent=1 // pred_check_branch
      %72 = sbr.rel (0) target = $region37
    $region36: #{tpu_custom_call.1} parent=1 // pred_region
      %73 = dma.done [#allocation6], 28672
    $region37: #{tpu_custom_call.1} parent=1 // pred_fallthru
      _
    // Predicated region
    $region38: #{tpu_custom_call.1} parent=1 // pred_check
      _
    $region39: #{tpu_custom_call.1} parent=1 // pred_check_branch
      %75 = sbr.rel (0) target = $region41
    $region40: #{tpu_custom_call.1} parent=1 // pred_region
      %76 = dma.done [#allocation6], 8192
    $region41: #{tpu_custom_call.1} parent=1 // pred_fallthru
      _
    // Predicated region
    $region42: #{tpu_custom_call.1} parent=1 // pred_check
      _
    $region43: #{tpu_custom_call.1} parent=1 // pred_check_branch
      %78 = sbr.rel (0) target = $region45
    $region44: #{tpu_custom_call.1} parent=1 // pred_region
      %79 = dma.done [#allocation9], 4096
    $region45: #{tpu_custom_call.1} parent=1 // pred_fallthru
      _
    %v80 = vld [vmem:[#allocation2] sm:$0xff]
    %v81 = vld [vmem:[#allocation2 + $0x8] sm:$0xff]
    %v82 = vld [vmem:[#allocation2 + $0x10] sm:$0xff]
    %v83 = vld [vmem:[#allocation2 + $0x18] sm:$0xff]
    %v84 = vld [vmem:[#allocation2 + $0x20] sm:$0xff]
    %v85 = vld [vmem:[#allocation2 + $0x28] sm:$0xff]
    %v86 = vld [vmem:[#allocation2 + $0x30] sm:$0xff]
    %v87 = vld [vmem:[#allocation5] sm:$0xff]
    %v88 = vld [vmem:[#allocation5 + $0x8] sm:$0xff]
    %v89 = vld [vmem:[#allocation5 + $0x10] sm:$0xff]
    %v90 = vld [vmem:[#allocation5 + $0x18] sm:$0xff]
    %v91 = vld [vmem:[#allocation5 + $0x20] sm:$0xff]
    %v92 = vld [vmem:[#allocation5 + $0x28] sm:$0xff]
    %v93 = vld [vmem:[#allocation5 + $0x30] sm:$0xff]
    %v94 = vld [vmem:[#allocation5 + $0x38] sm:$0xff]
    %v95 = vld [vmem:[#allocation5 + $0x40] sm:$0xff]
    %v96 = vld [vmem:[#allocation5 + $0x48] sm:$0xff]
    %v97 = vld [vmem:[#allocation5 + $0x50] sm:$0xff]
    %v98 = vld [vmem:[#allocation5 + $0x58] sm:$0xff]
    %v99 = vld [vmem:[#allocation5 + $0x60] sm:$0xff]
    %v100 = vld [vmem:[#allocation5 + $0x68] sm:$0xff]
    %v101 = vld [vmem:[#allocation5 + $0x70] sm:$0xff]
    %v102 = vld [vmem:[#allocation5 + $0x78] sm:$0xff]
    %v103 = vld [vmem:[#allocation5 + $0x80] sm:$0xff]
    %v104 = vld [vmem:[#allocation5 + $0x88] sm:$0xff]
    %v105 = vld [vmem:[#allocation5 + $0x90] sm:$0xff]
    %v106 = vld [vmem:[#allocation5 + $0x98] sm:$0xff]
    %v107 = vld [vmem:[#allocation5 + $0xa0] sm:$0xff]
    %v108 = vld [vmem:[#allocation5 + $0xa8] sm:$0xff]
    %v109 = vld [vmem:[#allocation5 + $0xb0] sm:$0xff]
    %v110 = vld [vmem:[#allocation5 + $0xb8] sm:$0xff]
    %v111 = vld [vmem:[#allocation5 + $0xc0] sm:$0xff]
    %v112 = vld [vmem:[#allocation5 + $0xc8] sm:$0xff]
    %v113 = vld [vmem:[#allocation5 + $0xd0] sm:$0xff]
    %v114 = vld [vmem:[#allocation5 + $0xd8] sm:$0xff]
    %v115 = vld [vmem:[#allocation5 + $0xe0] sm:$0xff]
    %v116 = vld [vmem:[#allocation5 + $0xe8] sm:$0xff]
    %v117 = vld [vmem:[#allocation5 + $0xf0] sm:$0xff]
    %v118 = vld [vmem:[#allocation5 + $0xf8] sm:$0xff]
    %v119 = vld [vmem:[#allocation5 + $0x100] sm:$0xff]
    %v120 = vld [vmem:[#allocation5 + $0x108] sm:$0xff]
    %v121 = vld [vmem:[#allocation5 + $0x110] sm:$0xff]
    %v122 = vld [vmem:[#allocation5 + $0x118] sm:$0xff]
    %v123 = vld [vmem:[#allocation5 + $0x120] sm:$0xff]
    %v124 = vld [vmem:[#allocation5 + $0x128] sm:$0xff]
    %v125 = vld [vmem:[#allocation5 + $0x130] sm:$0xff]
    %v126 = vld [vmem:[#allocation5 + $0x138] sm:$0xff]
    %v127 = vld [vmem:[#allocation5 + $0x140] sm:$0xff]
    %v128 = vld [vmem:[#allocation5 + $0x148] sm:$0xff]
    %v129 = vld [vmem:[#allocation5 + $0x150] sm:$0xff]
    %v130 = vld [vmem:[#allocation5 + $0x158] sm:$0xff]
    %v131 = vld [vmem:[#allocation5 + $0x160] sm:$0xff]
    %v132 = vld [vmem:[#allocation5 + $0x168] sm:$0xff]
    %v133 = vld [vmem:[#allocation5 + $0x170] sm:$0xff]
    %v134 = vld [vmem:[#allocation5 + $0x178] sm:$0xff]
    %v135 = vld [vmem:[#allocation5 + $0x180] sm:$0xff]
    %v136 = vld [vmem:[#allocation5 + $0x188] sm:$0xff]
    %v137 = vld [vmem:[#allocation5 + $0x190] sm:$0xff]
    %v138 = vld [vmem:[#allocation5 + $0x198] sm:$0xff]
    %v139 = vld [vmem:[#allocation5 + $0x1a0] sm:$0xff]
    %v140 = vld [vmem:[#allocation5 + $0x1a8] sm:$0xff]
    %v141 = vld [vmem:[#allocation5 + $0x1b0] sm:$0xff]
    %v142 = vld [vmem:[#allocation5 + $0x1b8] sm:$0xff]
    %v143 = vld [vmem:[#allocation5 + $0x1c0] sm:$0xff]
    %v144 = vld [vmem:[#allocation5 + $0x1c8] sm:$0xff]
    %v145 = vld [vmem:[#allocation5 + $0x1d0] sm:$0xff]
    %v146 = vld [vmem:[#allocation5 + $0x1d8] sm:$0xff]
    %v147 = vld [vmem:[#allocation5 + $0x1e0] sm:$0xff]
    %v148 = vld [vmem:[#allocation5 + $0x1e8] sm:$0xff]
    %v149 = vld [vmem:[#allocation5 + $0x1f0] sm:$0xff]
    %v150 = vld [vmem:[#allocation5 + $0x1f8] sm:$0xff]
    %v151 = vld [vmem:[#allocation5 + $0x200] sm:$0xff]
    %v152 = vld [vmem:[#allocation5 + $0x208] sm:$0xff]
    %v153 = vld [vmem:[#allocation5 + $0x210] sm:$0xff]
    %v154 = vld [vmem:[#allocation5 + $0x218] sm:$0xff]
    %v155 = vld [vmem:[#allocation5 + $0x220] sm:$0xff]
    %v156 = vld [vmem:[#allocation5 + $0x228] sm:$0xff]
    %v157 = vld [vmem:[#allocation5 + $0x230] sm:$0xff]
    %v158 = vld [vmem:[#allocation5 + $0x238] sm:$0xff]
    %v159 = vld [vmem:[#allocation5 + $0x240] sm:$0xff]
    %v160 = vld [vmem:[#allocation5 + $0x248] sm:$0xff]
    %v161 = vld [vmem:[#allocation5 + $0x250] sm:$0xff]
    %v162 = vld [vmem:[#allocation5 + $0x258] sm:$0xff]
    %v163 = vld [vmem:[#allocation5 + $0x260] sm:$0xff]
    %v164 = vld [vmem:[#allocation5 + $0x268] sm:$0xff]
    %v165 = vld [vmem:[#allocation5 + $0x270] sm:$0xff]
    %v166 = vld [vmem:[#allocation5 + $0x278] sm:$0xff]
    %v167 = vld [vmem:[#allocation5 + $0x280] sm:$0xff]
    %v168 = vld [vmem:[#allocation5 + $0x288] sm:$0xff]
    %v169 = vld [vmem:[#allocation5 + $0x290] sm:$0xff]
    %v170 = vld [vmem:[#allocation5 + $0x298] sm:$0xff]
    %v171 = vld [vmem:[#allocation5 + $0x2a0] sm:$0xff]
    %v172 = vld [vmem:[#allocation5 + $0x2a8] sm:$0xff]
    %v173 = vld [vmem:[#allocation5 + $0x2b0] sm:$0xff]
    %v174 = vld [vmem:[#allocation5 + $0x2b8] sm:$0xff]
    %v175 = vld [vmem:[#allocation5 + $0x2c0] sm:$0xff]
    %v176 = vld [vmem:[#allocation5 + $0x2c8] sm:$0xff]
    %v177 = vld [vmem:[#allocation5 + $0x2d0] sm:$0xff]
    %v178 = vld [vmem:[#allocation5 + $0x2d8] sm:$0xff]
    %v179 = vld [vmem:[#allocation5 + $0x2e0] sm:$0xff]
    %v180 = vld [vmem:[#allocation5 + $0x2e8] sm:$0xff]
    %v181 = vld [vmem:[#allocation5 + $0x2f0] sm:$0xff]
    %v182 = vld [vmem:[#allocation5 + $0x2f8] sm:$0xff]
    %v183 = vld [vmem:[#allocation5 + $0x300] sm:$0xff]
    %v184 = vld [vmem:[#allocation5 + $0x308] sm:$0xff]
    %v185 = vld [vmem:[#allocation5 + $0x310] sm:$0xff]
    %v186 = vld [vmem:[#allocation5 + $0x318] sm:$0xff]
    %v187 = vld [vmem:[#allocation5 + $0x320] sm:$0xff]
    %v188 = vld [vmem:[#allocation5 + $0x328] sm:$0xff]
    %v189 = vld [vmem:[#allocation5 + $0x330] sm:$0xff]
    %v190 = vld [vmem:[#allocation5 + $0x338] sm:$0xff]
    %v191 = vld [vmem:[#allocation5 + $0x340] sm:$0xff]
    %v192 = vld [vmem:[#allocation5 + $0x348] sm:$0xff]
    %v193 = vld [vmem:[#allocation5 + $0x350] sm:$0xff]
    %v194 = vld [vmem:[#allocation5 + $0x358] sm:$0xff]
    %v195 = vld [vmem:[#allocation5 + $0x360] sm:$0xff]
    %v196 = vld [vmem:[#allocation5 + $0x368] sm:$0xff]
    %v197 = vld [vmem:[#allocation5 + $0x370] sm:$0xff]
    %v198 = vld [vmem:[#allocation5 + $0x378] sm:$0xff]
    %v199 = vld [vmem:[#allocation5 + $0x380] sm:$0xff]
    %v200 = vld [vmem:[#allocation5 + $0x388] sm:$0xff]
    %v201 = vld [vmem:[#allocation5 + $0x390] sm:$0xff]
    %v202 = vld [vmem:[#allocation5 + $0x398] sm:$0xff]
    %v203 = vld [vmem:[#allocation5 + $0x3a0] sm:$0xff]
    %v204 = vld [vmem:[#allocation5 + $0x3a8] sm:$0xff]
    %v205 = vld [vmem:[#allocation5 + $0x3b0] sm:$0xff]
    %v206 = vld [vmem:[#allocation5 + $0x3b8] sm:$0xff]
    %v207 = vld [vmem:[#allocation5 + $0x3c0] sm:$0xff]
    %v208 = vld [vmem:[#allocation5 + $0x3c8] sm:$0xff]
    %v209 = vld [vmem:[#allocation5 + $0x3d0] sm:$0xff]
    %v210 = vld [vmem:[#allocation5 + $0x3d8] sm:$0xff]
    %v211 = vld [vmem:[#allocation5 + $0x3e0] sm:$0xff]
    %v212 = vld [vmem:[#allocation5 + $0x3e8] sm:$0xff]
    %v213 = vld [vmem:[#allocation5 + $0x3f0] sm:$0xff]
    %v214 = vld [vmem:[#allocation5 + $0x3f8] sm:$0xff]
    %v215 = vld [vmem:[#allocation5 + $0x400] sm:$0xff]
    %v216 = vld [vmem:[#allocation5 + $0x408] sm:$0xff]
    %v217 = vld [vmem:[#allocation5 + $0x410] sm:$0xff]
    %v218 = vld [vmem:[#allocation5 + $0x418] sm:$0xff]
    %v219 = vld [vmem:[#allocation5 + $0x420] sm:$0xff]
    %v220 = vld [vmem:[#allocation5 + $0x428] sm:$0xff]
    %v221 = vld [vmem:[#allocation5 + $0x430] sm:$0xff]
    %v222 = vld [vmem:[#allocation5 + $0x438] sm:$0xff]
    %v223 = vld [vmem:[#allocation5 + $0x440] sm:$0xff]
    %v224 = vld [vmem:[#allocation5 + $0x448] sm:$0xff]
    %v225 = vld [vmem:[#allocation5 + $0x450] sm:$0xff]
    %v226 = vld [vmem:[#allocation5 + $0x458] sm:$0xff]
    %v227 = vld [vmem:[#allocation5 + $0x460] sm:$0xff]
    %v228 = vld [vmem:[#allocation5 + $0x468] sm:$0xff]
    %v229 = vld [vmem:[#allocation5 + $0x470] sm:$0xff]
    %v230 = vld [vmem:[#allocation5 + $0x478] sm:$0xff]
    %v231 = vld [vmem:[#allocation5 + $0x480] sm:$0xff]
    %v232 = vld [vmem:[#allocation5 + $0x488] sm:$0xff]
    %v233 = vld [vmem:[#allocation5 + $0x490] sm:$0xff]
    %v234 = vld [vmem:[#allocation5 + $0x498] sm:$0xff]
    %v235 = vld [vmem:[#allocation5 + $0x4a0] sm:$0xff]
    %v236 = vld [vmem:[#allocation5 + $0x4a8] sm:$0xff]
    %v237 = vld [vmem:[#allocation5 + $0x4b0] sm:$0xff]
    %v238 = vld [vmem:[#allocation5 + $0x4b8] sm:$0xff]
    %v239 = vld [vmem:[#allocation5 + $0x4c0] sm:$0xff]
    %v240 = vld [vmem:[#allocation5 + $0x4c8] sm:$0xff]
    %v241 = vld [vmem:[#allocation5 + $0x4d0] sm:$0xff]
    %v242 = vld [vmem:[#allocation5 + $0x4d8] sm:$0xff]
    %v243 = vld [vmem:[#allocation5 + $0x4e0] sm:$0xff]
    %v244 = vld [vmem:[#allocation5 + $0x4e8] sm:$0xff]
    %v245 = vld [vmem:[#allocation5 + $0x4f0] sm:$0xff]
    %v246 = vld [vmem:[#allocation5 + $0x4f8] sm:$0xff]
    %v247 = vld [vmem:[#allocation5 + $0x500] sm:$0xff]
    %v248 = vld [vmem:[#allocation5 + $0x508] sm:$0xff]
    %v249 = vld [vmem:[#allocation5 + $0x510] sm:$0xff]
    %v250 = vld [vmem:[#allocation5 + $0x518] sm:$0xff]
    %v251 = vld [vmem:[#allocation5 + $0x520] sm:$0xff]
    %v252 = vld [vmem:[#allocation5 + $0x528] sm:$0xff]
    %v253 = vld [vmem:[#allocation5 + $0x530] sm:$0xff]
    %v254 = vld [vmem:[#allocation5 + $0x538] sm:$0xff]
    %v255 = vld [vmem:[#allocation5 + $0x540] sm:$0xff]
    %v256 = vld [vmem:[#allocation5 + $0x548] sm:$0xff]
    %v257 = vld [vmem:[#allocation5 + $0x550] sm:$0xff]
    %v258 = vld [vmem:[#allocation5 + $0x558] sm:$0xff]
    %v259 = vld [vmem:[#allocation5 + $0x560] sm:$0xff]
    %v260 = vld [vmem:[#allocation5 + $0x568] sm:$0xff]
    %v261 = vld [vmem:[#allocation5 + $0x570] sm:$0xff]
    %v262 = vld [vmem:[#allocation5 + $0x578] sm:$0xff]
    %v263 = vld [vmem:[#allocation5 + $0x580] sm:$0xff]
    %v264 = vld [vmem:[#allocation5 + $0x588] sm:$0xff]
    %v265 = vld [vmem:[#allocation5 + $0x590] sm:$0xff]
    %v266 = vld [vmem:[#allocation5 + $0x598] sm:$0xff]
    %v267 = vld [vmem:[#allocation5 + $0x5a0] sm:$0xff]
    %v268 = vld [vmem:[#allocation5 + $0x5a8] sm:$0xff]
    %v269 = vld [vmem:[#allocation5 + $0x5b0] sm:$0xff]
    %v270 = vld [vmem:[#allocation5 + $0x5b8] sm:$0xff]
    %v271 = vld [vmem:[#allocation5 + $0x5c0] sm:$0xff]
    %v272 = vld [vmem:[#allocation5 + $0x5c8] sm:$0xff]
    %v273 = vld [vmem:[#allocation5 + $0x5d0] sm:$0xff]
    %v274 = vld [vmem:[#allocation5 + $0x5d8] sm:$0xff]
    %v275 = vld [vmem:[#allocation5 + $0x5e0] sm:$0xff]
    %v276 = vld [vmem:[#allocation5 + $0x5e8] sm:$0xff]
    %v277 = vld [vmem:[#allocation5 + $0x5f0] sm:$0xff]
    %v278 = vld [vmem:[#allocation5 + $0x5f8] sm:$0xff]
    %v279 = vld [vmem:[#allocation5 + $0x600] sm:$0xff]
    %v280 = vld [vmem:[#allocation5 + $0x608] sm:$0xff]
    %v281 = vld [vmem:[#allocation5 + $0x610] sm:$0xff]
    %v282 = vld [vmem:[#allocation5 + $0x618] sm:$0xff]
    %v283 = vld [vmem:[#allocation5 + $0x620] sm:$0xff]
    %v284 = vld [vmem:[#allocation5 + $0x628] sm:$0xff]
    %v285 = vld [vmem:[#allocation5 + $0x630] sm:$0xff]
    %v286 = vld [vmem:[#allocation5 + $0x638] sm:$0xff]
    %v287 = vld [vmem:[#allocation5 + $0x640] sm:$0xff]
    %v288 = vld [vmem:[#allocation5 + $0x648] sm:$0xff]
    %v289 = vld [vmem:[#allocation5 + $0x650] sm:$0xff]
    %v290 = vld [vmem:[#allocation5 + $0x658] sm:$0xff]
    %v291 = vld [vmem:[#allocation5 + $0x660] sm:$0xff]
    %v292 = vld [vmem:[#allocation5 + $0x668] sm:$0xff]
    %v293 = vld [vmem:[#allocation5 + $0x670] sm:$0xff]
    %v294 = vld [vmem:[#allocation5 + $0x678] sm:$0xff]
    %v295 = vld [vmem:[#allocation5 + $0x680] sm:$0xff]
    %v296 = vld [vmem:[#allocation5 + $0x688] sm:$0xff]
    %v297 = vld [vmem:[#allocation5 + $0x690] sm:$0xff]
    %v298 = vld [vmem:[#allocation5 + $0x698] sm:$0xff]
    %v299 = vld [vmem:[#allocation5 + $0x6a0] sm:$0xff]
    %v300 = vld [vmem:[#allocation5 + $0x6a8] sm:$0xff]
    %v301 = vld [vmem:[#allocation5 + $0x6b0] sm:$0xff]
    %v302 = vld [vmem:[#allocation5 + $0x6b8] sm:$0xff]
    %v303 = vld [vmem:[#allocation5 + $0x6c0] sm:$0xff]
    %v304 = vld [vmem:[#allocation5 + $0x6c8] sm:$0xff]
    %v305 = vld [vmem:[#allocation5 + $0x6d0] sm:$0xff]
    %v306 = vld [vmem:[#allocation5 + $0x6d8] sm:$0xff]
    %v307 = vld [vmem:[#allocation5 + $0x6e0] sm:$0xff]
    %v308 = vld [vmem:[#allocation5 + $0x6e8] sm:$0xff]
    %v309 = vld [vmem:[#allocation5 + $0x6f0] sm:$0xff]
    %v310 = vld [vmem:[#allocation5 + $0x6f8] sm:$0xff]
    %v311 = vld [vmem:[%s2] sm:$0x3]
    %v313 = vlaneseq
    %v314 = vshrl.u32 %v313, 7
    %v315 = vsub.s32 0, %v314
    %v316 = vrot.slane %v311, %v315
    %v317 = vlaneseq
    %v318 = vshrl.u32 %v317, 7
    %v319 = vsub.s32 1, %v318
    %v320 = vrot.slane %v311, %v319
    %323 = vmatprep.subr.mxu0 %v88
    %324 = vmatpush1.msra.mxu0 %v87
    %325 = vmatprep.subr.mxu0 %v90
    %326 = vmatpush1.msra.mxu0 %v89
    %327 = vmatprep.subr.mxu0 %v92
    %328 = vmatpush1.msra.mxu0 %v91
    %329 = vmatprep.subr.mxu0 %v94
    %330 = vmatpush1.msra.mxu0 %v93
    %331 = vmatprep.subr.mxu0 %v96
    %332 = vmatpush1.msra.mxu0 %v95
    %333 = vmatprep.subr.mxu0 %v98
    %334 = vmatpush1.msra.mxu0 %v97
    %335 = vmatprep.subr.mxu0 %v100
    %336 = vmatpush1.msra.mxu0 %v99
    %337 = vmatprep.subr.mxu0 %v102
    %338 = vmatpush1.msra.mxu0 %v101
    %339 = vmatprep.subr.mxu0 %v104
    %340 = vmatpush1.msra.mxu0 %v103
    %341 = vmatprep.subr.mxu0 %v106
    %342 = vmatpush1.msra.mxu0 %v105
    %343 = vmatprep.subr.mxu0 %v108
    %344 = vmatpush1.msra.mxu0 %v107
    %345 = vmatprep.subr.mxu0 %v110
    %346 = vmatpush1.msra.mxu0 %v109
    %347 = vmatprep.subr.mxu0 %v112
    %348 = vmatpush1.msra.mxu0 %v111
    %349 = vmatprep.subr.mxu0 %v114
    %350 = vmatpush1.msra.mxu0 %v113
    %351 = vmatprep.subr.mxu0 %v116
    %352 = vmatpush1.msra.mxu0 %v115
    %353 = vmatprep.subr.mxu0 %v118
    %354 = vmatpush1.msra.mxu0 %v117
    %355 = vmatprep.subr.mxu0 %v120
    %356 = vmatpush1.msra.mxu0 %v119
    %357 = vmatprep.subr.mxu0 %v122
    %358 = vmatpush1.msra.mxu0 %v121
    %359 = vmatprep.subr.mxu0 %v124
    %360 = vmatpush1.msra.mxu0 %v123
    %361 = vmatprep.subr.mxu0 %v126
    %362 = vmatpush1.msra.mxu0 %v125
    %363 = vmatprep.subr.mxu0 %v128
    %364 = vmatpush1.msra.mxu0 %v127
    %365 = vmatprep.subr.mxu0 %v130
    %366 = vmatpush1.msra.mxu0 %v129
    %367 = vmatprep.subr.mxu0 %v132
    %368 = vmatpush1.msra.mxu0 %v131
    %369 = vmatprep.subr.mxu0 %v134
    %370 = vmatpush1.msra.mxu0 %v133
    %371 = vmatprep.subr.mxu0 %v136
    %372 = vmatpush1.msra.mxu0 %v135
    %373 = vmatprep.subr.mxu0 %v138
    %374 = vmatpush1.msra.mxu0 %v137
    %375 = vmatprep.subr.mxu0 %v140
    %376 = vmatpush1.msra.mxu0 %v139
    %377 = vmatprep.subr.mxu0 %v142
    %378 = vmatpush1.msra.mxu0 %v141
    %379 = vmatprep.subr.mxu0 %v144
    %380 = vmatpush1.msra.mxu0 %v143
    %381 = vmatprep.subr.mxu0 %v146
    %382 = vmatpush1.msra.mxu0 %v145
    %383 = vmatprep.subr.mxu0 %v148
    %384 = vmatpush1.msra.mxu0 %v147
    %385 = vmatprep.subr.mxu0 %v150
    %386 = vmatpush1.msra.mxu0 %v149
    %387 = vmatprep.mubr.f32.mxu0 %v81
    %388 = vmatmul.mubr.f32.gmra.mrb[0].mxu0 %v80
    %v389 = vpop.f32.mrb[0].mxu0
    %v390 = vadd.f32 %v316, %v389
    %v391 = vpop.f32.mrb[0].mxu0
    %v392 = vadd.f32 %v320, %v391
    %393 = vdwg.mxu0
    %394 = vmatprep.subr.mxu0 %v152
    %395 = vmatpush1.msra.mxu0 %v151
    %396 = vmatprep.subr.mxu0 %v154
    %397 = vmatpush1.msra.mxu0 %v153
    %398 = vmatprep.subr.mxu0 %v156
    %399 = vmatpush1.msra.mxu0 %v155
    %400 = vmatprep.subr.mxu0 %v158
    %401 = vmatpush1.msra.mxu0 %v157
    %402 = vmatprep.subr.mxu0 %v160
    %403 = vmatpush1.msra.mxu0 %v159
    %404 = vmatprep.subr.mxu0 %v162
    %405 = vmatpush1.msra.mxu0 %v161
    %406 = vmatprep.subr.mxu0 %v164
    %407 = vmatpush1.msra.mxu0 %v163
    %408 = vmatprep.subr.mxu0 %v166
    %409 = vmatpush1.msra.mxu0 %v165
    %410 = vmatprep.subr.mxu0 %v168
    %411 = vmatpush1.msra.mxu0 %v167
    %412 = vmatprep.subr.mxu0 %v170
    %413 = vmatpush1.msra.mxu0 %v169
    %414 = vmatprep.subr.mxu0 %v172
    %415 = vmatpush1.msra.mxu0 %v171
    %416 = vmatprep.subr.mxu0 %v174
    %417 = vmatpush1.msra.mxu0 %v173
    %418 = vmatprep.subr.mxu0 %v176
    %419 = vmatpush1.msra.mxu0 %v175
    %420 = vmatprep.subr.mxu0 %v178
    %421 = vmatpush1.msra.mxu0 %v177
    %422 = vmatprep.subr.mxu0 %v180
    %423 = vmatpush1.msra.mxu0 %v179
    %424 = vmatprep.subr.mxu0 %v182
    %425 = vmatpush1.msra.mxu0 %v181
    %426 = vmatprep.subr.mxu0 %v184
    %427 = vmatpush1.msra.mxu0 %v183
    %428 = vmatprep.subr.mxu0 %v186
    %429 = vmatpush1.msra.mxu0 %v185
    %430 = vmatprep.subr.mxu0 %v188
    %431 = vmatpush1.msra.mxu0 %v187
    %432 = vmatprep.subr.mxu0 %v190
    %433 = vmatpush1.msra.mxu0 %v189
    %434 = vmatprep.subr.mxu0 %v192
    %435 = vmatpush1.msra.mxu0 %v191
    %436 = vmatprep.subr.mxu0 %v194
    %437 = vmatpush1.msra.mxu0 %v193
    %438 = vmatprep.subr.mxu0 %v196
    %439 = vmatpush1.msra.mxu0 %v195
    %440 = vmatprep.subr.mxu0 %v198
    %441 = vmatpush1.msra.mxu0 %v197
    %442 = vmatprep.subr.mxu0 %v200
    %443 = vmatpush1.msra.mxu0 %v199
    %444 = vmatprep.subr.mxu0 %v202
    %445 = vmatpush1.msra.mxu0 %v201
    %446 = vmatprep.subr.mxu0 %v204
    %447 = vmatpush1.msra.mxu0 %v203
    %448 = vmatprep.subr.mxu0 %v206
    %449 = vmatpush1.msra.mxu0 %v205
    %450 = vmatprep.subr.mxu0 %v208
    %451 = vmatpush1.msra.mxu0 %v207
    %452 = vmatprep.subr.mxu0 %v210
    %453 = vmatpush1.msra.mxu0 %v209
    %454 = vmatprep.subr.mxu0 %v212
    %455 = vmatpush1.msra.mxu0 %v211
    %456 = vmatprep.subr.mxu0 %v214
    %457 = vmatpush1.msra.mxu0 %v213
    %458 = vmatprep.mubr.f32.mxu0 %v83
    %459 = vmatmul.mubr.f32.gmra.mrb[0].mxu0 %v82
    %v460 = vpop.f32.mrb[0].mxu0
    %v461 = vadd.f32 %v390, %v460
    %v462 = vpop.f32.mrb[0].mxu0
    %v463 = vadd.f32 %v392, %v462
    %464 = vdwg.mxu0
    %465 = vmatprep.subr.mxu0 %v216
    %466 = vmatpush1.msra.mxu0 %v215
    %467 = vmatprep.subr.mxu0 %v218
    %468 = vmatpush1.msra.mxu0 %v217
    %469 = vmatprep.subr.mxu0 %v220
    %470 = vmatpush1.msra.mxu0 %v219
    %471 = vmatprep.subr.mxu0 %v222
    %472 = vmatpush1.msra.mxu0 %v221
    %473 = vmatprep.subr.mxu0 %v224
    %474 = vmatpush1.msra.mxu0 %v223
    %475 = vmatprep.subr.mxu0 %v226
    %476 = vmatpush1.msra.mxu0 %v225
    %477 = vmatprep.subr.mxu0 %v228
    %478 = vmatpush1.msra.mxu0 %v227
    %479 = vmatprep.subr.mxu0 %v230
    %480 = vmatpush1.msra.mxu0 %v229
    %481 = vmatprep.subr.mxu0 %v232
    %482 = vmatpush1.msra.mxu0 %v231
    %483 = vmatprep.subr.mxu0 %v234
    %484 = vmatpush1.msra.mxu0 %v233
    %485 = vmatprep.subr.mxu0 %v236
    %486 = vmatpush1.msra.mxu0 %v235
    %487 = vmatprep.subr.mxu0 %v238
    %488 = vmatpush1.msra.mxu0 %v237
    %489 = vmatprep.subr.mxu0 %v240
    %490 = vmatpush1.msra.mxu0 %v239
    %491 = vmatprep.subr.mxu0 %v242
    %492 = vmatpush1.msra.mxu0 %v241
    %493 = vmatprep.subr.mxu0 %v244
    %494 = vmatpush1.msra.mxu0 %v243
    %495 = vmatprep.subr.mxu0 %v246
    %496 = vmatpush1.msra.mxu0 %v245
    %497 = vmatprep.subr.mxu0 %v248
    %498 = vmatpush1.msra.mxu0 %v247
    %499 = vmatprep.subr.mxu0 %v250
    %500 = vmatpush1.msra.mxu0 %v249
    %501 = vmatprep.subr.mxu0 %v252
    %502 = vmatpush1.msra.mxu0 %v251
    %503 = vmatprep.subr.mxu0 %v254
    %504 = vmatpush1.msra.mxu0 %v253
    %505 = vmatprep.subr.mxu0 %v256
    %506 = vmatpush1.msra.mxu0 %v255
    %507 = vmatprep.subr.mxu0 %v258
    %508 = vmatpush1.msra.mxu0 %v257
    %509 = vmatprep.subr.mxu0 %v260
    %510 = vmatpush1.msra.mxu0 %v259
    %511 = vmatprep.subr.mxu0 %v262
    %512 = vmatpush1.msra.mxu0 %v261
    %513 = vmatprep.subr.mxu0 %v264
    %514 = vmatpush1.msra.mxu0 %v263
    %515 = vmatprep.subr.mxu0 %v266
    %516 = vmatpush1.msra.mxu0 %v265
    %517 = vmatprep.subr.mxu0 %v268
    %518 = vmatpush1.msra.mxu0 %v267
    %519 = vmatprep.subr.mxu0 %v270
    %520 = vmatpush1.msra.mxu0 %v269
    %521 = vmatprep.subr.mxu0 %v272
    %522 = vmatpush1.msra.mxu0 %v271
    %523 = vmatprep.subr.mxu0 %v274
    %524 = vmatpush1.msra.mxu0 %v273
    %525 = vmatprep.subr.mxu0 %v276
    %526 = vmatpush1.msra.mxu0 %v275
    %527 = vmatprep.subr.mxu0 %v278
    %528 = vmatpush1.msra.mxu0 %v277
    %529 = vmatprep.mubr.f32.mxu0 %v85
    %530 = vmatmul.mubr.f32.gmra.mrb[0].mxu0 %v84
    %v531 = vpop.f32.mrb[0].mxu0
    %v532 = vadd.f32 %v461, %v531
    %v533 = vpop.f32.mrb[0].mxu0
    %v534 = vadd.f32 %v463, %v533
    %535 = vdwg.mxu0
    %536 = vmatprep.subr.mxu0 %v280
    %537 = vmatpush1.msra.mxu0 %v279
    %538 = vmatprep.subr.mxu0 %v282
    %539 = vmatpush1.msra.mxu0 %v281
    %540 = vmatprep.subr.mxu0 %v284
    %541 = vmatpush1.msra.mxu0 %v283
    %542 = vmatprep.subr.mxu0 %v286
    %543 = vmatpush1.msra.mxu0 %v285
    %544 = vmatprep.subr.mxu0 %v288
    %545 = vmatpush1.msra.mxu0 %v287
    %546 = vmatprep.subr.mxu0 %v290
    %547 = vmatpush1.msra.mxu0 %v289
    %548 = vmatprep.subr.mxu0 %v292
    %549 = vmatpush1.msra.mxu0 %v291
    %550 = vmatprep.subr.mxu0 %v294
    %551 = vmatpush1.msra.mxu0 %v293
    %552 = vmatprep.subr.mxu0 %v296
    %553 = vmatpush1.msra.mxu0 %v295
    %554 = vmatprep.subr.mxu0 %v298
    %555 = vmatpush1.msra.mxu0 %v297
    %556 = vmatprep.subr.mxu0 %v300
    %557 = vmatpush1.msra.mxu0 %v299
    %558 = vmatprep.subr.mxu0 %v302
    %559 = vmatpush1.msra.mxu0 %v301
    %560 = vmatprep.subr.mxu0 %v304
    %561 = vmatpush1.msra.mxu0 %v303
    %562 = vmatprep.subr.mxu0 %v306
    %563 = vmatpush1.msra.mxu0 %v305
    %564 = vmatprep.subr.mxu0 %v308
    %565 = vmatpush1.msra.mxu0 %v307
    %566 = vmatprep.subr.mxu0 %v310
    %567 = vmatpush1.msra.mxu0 %v309
    %568 = vmatprep.subr.mxu0 0.0
    %569 = vmatpush1.msra.mxu0 0.0
    %570 = vmatprep.subr.mxu0 0.0
    %571 = vmatpush1.msra.mxu0 0.0
    %572 = vmatprep.subr.mxu0 0.0
    %573 = vmatpush1.msra.mxu0 0.0
    %574 = vmatprep.subr.mxu0 0.0
    %575 = vmatpush1.msra.mxu0 0.0
    %576 = vmatprep.subr.mxu0 0.0
    %577 = vmatpush1.msra.mxu0 0.0
    %578 = vmatprep.subr.mxu0 0.0
    %579 = vmatpush1.msra.mxu0 0.0
    %580 = vmatprep.subr.mxu0 0.0
    %581 = vmatpush1.msra.mxu0 0.0
    %582 = vmatprep.subr.mxu0 0.0
    %583 = vmatpush1.msra.mxu0 0.0
    %584 = vmatprep.subr.mxu0 0.0
    %585 = vmatpush1.msra.mxu0 0.0
    %586 = vmatprep.subr.mxu0 0.0
    %587 = vmatpush1.msra.mxu0 0.0
    %588 = vmatprep.subr.mxu0 0.0
    %589 = vmatpush1.msra.mxu0 0.0
    %590 = vmatprep.subr.mxu0 0.0
    %591 = vmatpush1.msra.mxu0 0.0
    %592 = vmatprep.subr.mxu0 0.0
    %593 = vmatpush1.msra.mxu0 0.0
    %594 = vmatprep.subr.mxu0 0.0
    %595 = vmatpush1.msra.mxu0 0.0
    %596 = vmatprep.subr.mxu0 0.0
    %597 = vmatpush1.msra.mxu0 0.0
    %598 = vmatprep.subr.mxu0 0.0
    %599 = vmatpush1.msra.mxu0 0.0
    %600 = vmatprep.mubr.f32.mxu0 0.0
    %601 = vmatmul.mubr.f32.gmra.mrb[0].mxu0 %v86
    %v602 = vpop.f32.mrb[0].mxu0
    %v603 = vadd.f32 %v532, %v602
    %v604 = vpop.f32.mrb[0].mxu0
    %v605 = vadd.f32 %v534, %v604
    %606 = vdwg.mxu0
    %v607 = vmax.f32 %v603, 0.0
    %v608 = vmax.f32 %v605, 0.0
    %v609 = vld [vmem:[#allocation7] sm:$0xff]
    %v610 = vld [vmem:[#allocation7 + $0x8] sm:$0xff]
    %v611 = vld [vmem:[#allocation7 + $0x10] sm:$0xff]
    %v612 = vld [vmem:[#allocation7 + $0x18] sm:$0xff]
    %v613 = vld [vmem:[#allocation7 + $0x20] sm:$0xff]
    %v614 = vld [vmem:[#allocation7 + $0x28] sm:$0xff]
    %v615 = vld [vmem:[#allocation7 + $0x30] sm:$0xff]
    %v616 = vld [vmem:[#allocation7 + $0x38] sm:$0xff]
    %v617 = vld [vmem:[#allocation7 + $0x40] sm:$0xff]
    %v618 = vld [vmem:[#allocation7 + $0x48] sm:$0xff]
    %v619 = vld [vmem:[#allocation7 + $0x50] sm:$0xff]
    %v620 = vld [vmem:[#allocation7 + $0x58] sm:$0xff]
    %v621 = vld [vmem:[#allocation7 + $0x60] sm:$0xff]
    %v622 = vld [vmem:[#allocation7 + $0x68] sm:$0xff]
    %v623 = vld [vmem:[#allocation7 + $0x70] sm:$0xff]
    %v624 = vld [vmem:[#allocation7 + $0x78] sm:$0xff]
    %v625 = vld [vmem:[#allocation7 + $0x80] sm:$0xff]
    %v626 = vld [vmem:[#allocation7 + $0x88] sm:$0xff]
    %v627 = vld [vmem:[#allocation7 + $0x90] sm:$0xff]
    %v628 = vld [vmem:[#allocation7 + $0x98] sm:$0xff]
    %v629 = vld [vmem:[#allocation7 + $0xa0] sm:$0xff]
    %v630 = vld [vmem:[#allocation7 + $0xa8] sm:$0xff]
    %v631 = vld [vmem:[#allocation7 + $0xb0] sm:$0xff]
    %v632 = vld [vmem:[#allocation7 + $0xb8] sm:$0xff]
    %v633 = vld [vmem:[#allocation7 + $0xc0] sm:$0xff]
    %v634 = vld [vmem:[#allocation7 + $0xc8] sm:$0xff]
    %v635 = vld [vmem:[#allocation7 + $0xd0] sm:$0xff]
    %v636 = vld [vmem:[#allocation7 + $0xd8] sm:$0xff]
    %v637 = vld [vmem:[#allocation7 + $0xe0] sm:$0xff]
    %v638 = vld [vmem:[#allocation7 + $0xe8] sm:$0xff]
    %v639 = vld [vmem:[#allocation7 + $0xf0] sm:$0xff]
    %v640 = vld [vmem:[#allocation7 + $0xf8] sm:$0xff]
    %v641 = vld [vmem:[#allocation7 + $0x100] sm:$0xff]
    %v642 = vld [vmem:[#allocation7 + $0x108] sm:$0xff]
    %v643 = vld [vmem:[#allocation7 + $0x110] sm:$0xff]
    %v644 = vld [vmem:[#allocation7 + $0x118] sm:$0xff]
    %v645 = vld [vmem:[#allocation7 + $0x120] sm:$0xff]
    %v646 = vld [vmem:[#allocation7 + $0x128] sm:$0xff]
    %v647 = vld [vmem:[#allocation7 + $0x130] sm:$0xff]
    %v648 = vld [vmem:[#allocation7 + $0x138] sm:$0xff]
    %v649 = vld [vmem:[#allocation7 + $0x140] sm:$0xff]
    %v650 = vld [vmem:[#allocation7 + $0x148] sm:$0xff]
    %v651 = vld [vmem:[#allocation7 + $0x150] sm:$0xff]
    %v652 = vld [vmem:[#allocation7 + $0x158] sm:$0xff]
    %v653 = vld [vmem:[#allocation7 + $0x160] sm:$0xff]
    %v654 = vld [vmem:[#allocation7 + $0x168] sm:$0xff]
    %v655 = vld [vmem:[#allocation7 + $0x170] sm:$0xff]
    %v656 = vld [vmem:[#allocation7 + $0x178] sm:$0xff]
    %v657 = vld [vmem:[#allocation7 + $0x180] sm:$0xff]
    %v658 = vld [vmem:[#allocation7 + $0x188] sm:$0xff]
    %v659 = vld [vmem:[#allocation7 + $0x190] sm:$0xff]
    %v660 = vld [vmem:[#allocation7 + $0x198] sm:$0xff]
    %v661 = vld [vmem:[#allocation7 + $0x1a0] sm:$0xff]
    %v662 = vld [vmem:[#allocation7 + $0x1a8] sm:$0xff]
    %v663 = vld [vmem:[#allocation7 + $0x1b0] sm:$0xff]
    %v664 = vld [vmem:[#allocation7 + $0x1b8] sm:$0xff]
    %v665 = vld [vmem:[#allocation7 + $0x1c0] sm:$0xff]
    %v666 = vld [vmem:[#allocation7 + $0x1c8] sm:$0xff]
    %v667 = vld [vmem:[#allocation7 + $0x1d0] sm:$0xff]
    %v668 = vld [vmem:[#allocation7 + $0x1d8] sm:$0xff]
    %v669 = vld [vmem:[#allocation7 + $0x1e0] sm:$0xff]
    %v670 = vld [vmem:[#allocation7 + $0x1e8] sm:$0xff]
    %v671 = vld [vmem:[#allocation7 + $0x1f0] sm:$0xff]
    %v672 = vld [vmem:[#allocation7 + $0x1f8] sm:$0xff]
    %v673 = vld [vmem:[%s4] sm:$0x3]
    %v675 = vlaneseq
    %v676 = vshrl.u32 %v675, 7
    %v677 = vsub.s32 0, %v676
    %v678 = vrot.slane %v673, %v677
    %v679 = vlaneseq
    %v680 = vshrl.u32 %v679, 7
    %v681 = vsub.s32 1, %v680
    %v682 = vrot.slane %v673, %v681
    %685 = vmatprep.subr.mxu0 %v610
    %686 = vmatpush1.msra.mxu0 %v609
    %687 = vmatprep.subr.mxu0 %v612
    %688 = vmatpush1.msra.mxu0 %v611
    %689 = vmatprep.subr.mxu0 %v614
    %690 = vmatpush1.msra.mxu0 %v613
    %691 = vmatprep.subr.mxu0 %v616
    %692 = vmatpush1.msra.mxu0 %v615
    %693 = vmatprep.subr.mxu0 %v618
    %694 = vmatpush1.msra.mxu0 %v617
    %695 = vmatprep.subr.mxu0 %v620
    %696 = vmatpush1.msra.mxu0 %v619
    %697 = vmatprep.subr.mxu0 %v622
    %698 = vmatpush1.msra.mxu0 %v621
    %699 = vmatprep.subr.mxu0 %v624
    %700 = vmatpush1.msra.mxu0 %v623
    %701 = vmatprep.subr.mxu0 %v626
    %702 = vmatpush1.msra.mxu0 %v625
    %703 = vmatprep.subr.mxu0 %v628
    %704 = vmatpush1.msra.mxu0 %v627
    %705 = vmatprep.subr.mxu0 %v630
    %706 = vmatpush1.msra.mxu0 %v629
    %707 = vmatprep.subr.mxu0 %v632
    %708 = vmatpush1.msra.mxu0 %v631
    %709 = vmatprep.subr.mxu0 %v634
    %710 = vmatpush1.msra.mxu0 %v633
    %711 = vmatprep.subr.mxu0 %v636
    %712 = vmatpush1.msra.mxu0 %v635
    %713 = vmatprep.subr.mxu0 %v638
    %714 = vmatpush1.msra.mxu0 %v637
    %715 = vmatprep.subr.mxu0 %v640
    %716 = vmatpush1.msra.mxu0 %v639
    %717 = vmatprep.subr.mxu0 %v642
    %718 = vmatpush1.msra.mxu0 %v641
    %719 = vmatprep.subr.mxu0 %v644
    %720 = vmatpush1.msra.mxu0 %v643
    %721 = vmatprep.subr.mxu0 %v646
    %722 = vmatpush1.msra.mxu0 %v645
    %723 = vmatprep.subr.mxu0 %v648
    %724 = vmatpush1.msra.mxu0 %v647
    %725 = vmatprep.subr.mxu0 %v650
    %726 = vmatpush1.msra.mxu0 %v649
    %727 = vmatprep.subr.mxu0 %v652
    %728 = vmatpush1.msra.mxu0 %v651
    %729 = vmatprep.subr.mxu0 %v654
    %730 = vmatpush1.msra.mxu0 %v653
    %731 = vmatprep.subr.mxu0 %v656
    %732 = vmatpush1.msra.mxu0 %v655
    %733 = vmatprep.subr.mxu0 %v658
    %734 = vmatpush1.msra.mxu0 %v657
    %735 = vmatprep.subr.mxu0 %v660
    %736 = vmatpush1.msra.mxu0 %v659
    %737 = vmatprep.subr.mxu0 %v662
    %738 = vmatpush1.msra.mxu0 %v661
    %739 = vmatprep.subr.mxu0 %v664
    %740 = vmatpush1.msra.mxu0 %v663
    %741 = vmatprep.subr.mxu0 %v666
    %742 = vmatpush1.msra.mxu0 %v665
    %743 = vmatprep.subr.mxu0 %v668
    %744 = vmatpush1.msra.mxu0 %v667
    %745 = vmatprep.subr.mxu0 %v670
    %746 = vmatpush1.msra.mxu0 %v669
    %747 = vmatprep.subr.mxu0 %v672
    %748 = vmatpush1.msra.mxu0 %v671
    %749 = vmatprep.mubr.f32.mxu0 %v608
    %750 = vmatmul.mubr.f32.gmra.mrb[0].mxu0 %v607
    %v751 = vpop.f32.mrb[0].mxu0
    %v752 = vadd.f32 %v678, %v751
    %v753 = vpop.f32.mrb[0].mxu0
    %v754 = vadd.f32 %v682, %v753
    %755 = vdwg.mxu0
    %v756 = vmax.f32 %v752, 0.0
    %v757 = vmax.f32 %v754, 0.0
    %v758 = vld [vmem:[#allocation8] sm:$0xff]
    %v759 = vld [vmem:[#allocation8 + $0x8] sm:$0xff]
    %v760 = vld [vmem:[#allocation8 + $0x10] sm:$0xff]
    %v761 = vld [vmem:[#allocation8 + $0x18] sm:$0xff]
    %v762 = vld [vmem:[#allocation8 + $0x20] sm:$0xff]
    %v763 = vld [vmem:[#allocation8 + $0x28] sm:$0xff]
    %v764 = vld [vmem:[#allocation8 + $0x30] sm:$0xff]
    %v765 = vld [vmem:[#allocation8 + $0x38] sm:$0xff]
    %v766 = vld [vmem:[#allocation8 + $0x40] sm:$0xff]
    %v767 = vld [vmem:[#allocation8 + $0x48] sm:$0xff]
    %v768 = vld [vmem:[#allocation8 + $0x50] sm:$0xff]
    %v769 = vld [vmem:[#allocation8 + $0x58] sm:$0xff]
    %v770 = vld [vmem:[#allocation8 + $0x60] sm:$0xff]
    %v771 = vld [vmem:[#allocation8 + $0x68] sm:$0xff]
    %v772 = vld [vmem:[#allocation8 + $0x70] sm:$0xff]
    %v773 = vld [vmem:[#allocation8 + $0x78] sm:$0xff]
    %v774 = vld [vmem:[#allocation8 + $0x80] sm:$0xff]
    %v775 = vld [vmem:[#allocation8 + $0x88] sm:$0xff]
    %v776 = vld [vmem:[#allocation8 + $0x90] sm:$0xff]
    %v777 = vld [vmem:[#allocation8 + $0x98] sm:$0xff]
    %v778 = vld [vmem:[#allocation8 + $0xa0] sm:$0xff]
    %v779 = vld [vmem:[#allocation8 + $0xa8] sm:$0xff]
    %v780 = vld [vmem:[#allocation8 + $0xb0] sm:$0xff]
    %v781 = vld [vmem:[#allocation8 + $0xb8] sm:$0xff]
    %v782 = vld [vmem:[#allocation8 + $0xc0] sm:$0xff]
    %v783 = vld [vmem:[#allocation8 + $0xc8] sm:$0xff]
    %v784 = vld [vmem:[#allocation8 + $0xd0] sm:$0xff]
    %v785 = vld [vmem:[#allocation8 + $0xd8] sm:$0xff]
    %v786 = vld [vmem:[#allocation8 + $0xe0] sm:$0xff]
    %v787 = vld [vmem:[#allocation8 + $0xe8] sm:$0xff]
    %v788 = vld [vmem:[#allocation8 + $0xf0] sm:$0xff]
    %v789 = vld [vmem:[#allocation8 + $0xf8] sm:$0xff]
    %v790 = vld [vmem:[%s6] sm:$0x1]
    %v792 = vlaneseq
    %v793 = vshrl.u32 %v792, 7
    %v794 = vsub.s32 0, %v793
    %v795 = vrot.slane %v790, %v794
    %797 = vmatprep.subr.mxu0 0.0
    %798 = vmatpush1.msra.mxu0 %v758
    %799 = vmatprep.subr.mxu0 0.0
    %800 = vmatpush1.msra.mxu0 %v759
    %801 = vmatprep.subr.mxu0 0.0
    %802 = vmatpush1.msra.mxu0 %v760
    %803 = vmatprep.subr.mxu0 0.0
    %804 = vmatpush1.msra.mxu0 %v761
    %805 = vmatprep.subr.mxu0 0.0
    %806 = vmatpush1.msra.mxu0 %v762
    %807 = vmatprep.subr.mxu0 0.0
    %808 = vmatpush1.msra.mxu0 %v763
    %809 = vmatprep.subr.mxu0 0.0
    %810 = vmatpush1.msra.mxu0 %v764
    %811 = vmatprep.subr.mxu0 0.0
    %812 = vmatpush1.msra.mxu0 %v765
    %813 = vmatprep.subr.mxu0 0.0
    %814 = vmatpush1.msra.mxu0 %v766
    %815 = vmatprep.subr.mxu0 0.0
    %816 = vmatpush1.msra.mxu0 %v767
    %817 = vmatprep.subr.mxu0 0.0
    %818 = vmatpush1.msra.mxu0 %v768
    %819 = vmatprep.subr.mxu0 0.0
    %820 = vmatpush1.msra.mxu0 %v769
    %821 = vmatprep.subr.mxu0 0.0
    %822 = vmatpush1.msra.mxu0 %v770
    %823 = vmatprep.subr.mxu0 0.0
    %824 = vmatpush1.msra.mxu0 %v771
    %825 = vmatprep.subr.mxu0 0.0
    %826 = vmatpush1.msra.mxu0 %v772
    %827 = vmatprep.subr.mxu0 0.0
    %828 = vmatpush1.msra.mxu0 %v773
    %829 = vmatprep.subr.mxu0 0.0
    %830 = vmatpush1.msra.mxu0 %v774
    %831 = vmatprep.subr.mxu0 0.0
    %832 = vmatpush1.msra.mxu0 %v775
    %833 = vmatprep.subr.mxu0 0.0
    %834 = vmatpush1.msra.mxu0 %v776
    %835 = vmatprep.subr.mxu0 0.0
    %836 = vmatpush1.msra.mxu0 %v777
    %837 = vmatprep.subr.mxu0 0.0
    %838 = vmatpush1.msra.mxu0 %v778
    %839 = vmatprep.subr.mxu0 0.0
    %840 = vmatpush1.msra.mxu0 %v779
    %841 = vmatprep.subr.mxu0 0.0
    %842 = vmatpush1.msra.mxu0 %v780
    %843 = vmatprep.subr.mxu0 0.0
    %844 = vmatpush1.msra.mxu0 %v781
    %845 = vmatprep.subr.mxu0 0.0
    %846 = vmatpush1.msra.mxu0 %v782
    %847 = vmatprep.subr.mxu0 0.0
    %848 = vmatpush1.msra.mxu0 %v783
    %849 = vmatprep.subr.mxu0 0.0
    %850 = vmatpush1.msra.mxu0 %v784
    %851 = vmatprep.subr.mxu0 0.0
    %852 = vmatpush1.msra.mxu0 %v785
    %853 = vmatprep.subr.mxu0 0.0
    %854 = vmatpush1.msra.mxu0 %v786
    %855 = vmatprep.subr.mxu0 0.0
    %856 = vmatpush1.msra.mxu0 %v787
    %857 = vmatprep.subr.mxu0 0.0
    %858 = vmatpush1.msra.mxu0 %v788
    %859 = vmatprep.subr.mxu0 0.0
    %860 = vmatpush1.msra.mxu0 %v789
    %861 = vmatprep.mubr.f32.mxu0 %v757
    %862 = vmatmul.mubr.f32.gmra.mrb[0].mxu0 %v756
    %v863 = vpop.f32.mrb[0].mxu0
    %v864 = vadd.f32 %v795, %v863
    %v865 = vpop.f32.mrb[0].mxu0
    %866 = vdwg.mxu0
    %867 = vst [vmem:[#allocation10] sm:$0xff] %v864
    // Predicated region
    $region46: #{tpu_custom_call.1} parent=1 // pred_check
      _
    $region47: #{tpu_custom_call.1} parent=1 // pred_check_branch
      %869 = sbr.rel (0) target = $region49
    $region48: #{tpu_custom_call.1} parent=1 // pred_region
      %s871 = ssub.s32 128, 128
      %872 = vsyncadd [#allocation4], %s871
      %s874 = sshll.u32 [#allocation10], 4
      %s875 = int_to_ptr.vmem [resolvable:$true] %s874
      %877 = dma.vmem_to_hbm [thread:$0]  %s875, 128, %s7, [#allocation4]
    $region49: #{tpu_custom_call.1} parent=1 // pred_fallthru
      _
    // Predicated region
    $region50: #{tpu_custom_call.1} parent=1 // pred_check
      _
    $region51: #{tpu_custom_call.1} parent=1 // pred_check_branch
      %879 = sbr.rel (0) target = $region53
    $region52: #{tpu_custom_call.1} parent=1 // pred_region
      %880 = dma.done [#allocation4], 128
    $region53: #{tpu_custom_call.1} parent=1 // pred_fallthru
      _
    %881 = vsyncpa [#allocation3], 1
    %882 = vsyncpa [#allocation6], 1
    %883 = vsyncpa [#allocation9], 1
    %884 = vsyncpa [#allocation4], 1

</llo_original>
